<compile_context>
chip_gen: v6e
topology: v6e:2x2x1
jax: 0.10.0
libtpu: 0.0.40
codegen_flags: <defaults>
</compile_context>

<pallas_src>
import jax
import jax.numpy as jnp
from jax.experimental import pallas as pl
from jax.experimental.pallas import tpu as pltpu


def _fused_kernel(w_ref, b_ref, x_ref, o_ref, acc_ref):
    # w_ref: (C_aux_p, tk)   b_ref: (C_aux_p, 1) f32
    # x_ref: (tk, tw)        o_ref: (C_aux_p, tw)   acc_ref: (C_aux_p, tw) f32
    k = pl.program_id(2)

    @pl.when(k == 0)
    def _():
        acc_ref[...] = jnp.zeros_like(acc_ref)

    acc_ref[...] += jnp.dot(w_ref[...], x_ref[...],
                            preferred_element_type=jnp.float32)

    @pl.when(k == pl.num_programs(2) - 1)
    def _():
        o_ref[...] = (acc_ref[...] + b_ref[...]).astype(o_ref.dtype)


def _pick_tiles(B, K, W, itemsize, max_tile_bytes=8 << 20):
    """Pick (tk, tw) for the streamed x block (tk = sublane/K dim, tw = lane/W).

    Legality: tw must be a multiple of 128 or the full W; tk must be a multiple
    of 128 (it is also w_eff's lane dim) or the full K.
    """
    budget_elems = max(max_tile_bytes // itemsize, 8 * 128)

    # Lane (W) tile: biggest multiple of 128 dividing W; tiny / irregular W
    # falls back to a full-dim block (still legal).
    tw = W
    for cand in (2048, 1024, 512, 256, 128):
        if W % cand == 0:
            tw = cand
            break

    # K tile: biggest multiple-of-128 divisor of K whose x block fits the
    # budget.  Only when K has no such divisor do we take the full K, and then
    # shrink the W tile (if legal) to stay inside the budget — no more
    # "single giant (K, N) block" fallback.
    if K % 128 == 0:
        divisors = [d for d in range(128, K + 1, 128) if K % d == 0]
        tk = 128
        for d in reversed(divisors):
            if d * tw <= budget_elems:
                tk = d
                break
    else:
        tk = K
    while tk * tw > budget_elems and tw % 256 == 0:
        tw //= 2

    # v7x megacore: keep >= 2 parallel grid steps when possible so neither
    # TensorCore idles.
    if B * (W // tw) < 2 and tw % 256 == 0:
        tw //= 2

    return tk, tw


def aux_block(x, w1, b1, w2, b2):
    """x: (B, C_in, H, W);  w1: (C_aux, C_in);  b1: (C_aux,);
       w2: (C_aux, H);      b2: (C_aux,).   Returns (B, C_aux, W)."""
    B, C_in, H, W = x.shape
    C_aux = w1.shape[0]
    K = C_in * H
    itemsize = jnp.dtype(x.dtype).itemsize

    # --- conv1 + conv2 fusion, formed in f32 (then cast the streamed weight) --
    w1f = w1.astype(jnp.float32)
    w2f = w2.astype(jnp.float32)
    w_eff = (w1f[:, :, None] * w2f[:, None, :]).reshape(C_aux, K)       # (C_aux, K)
    b_eff = b2.astype(jnp.float32) + b1.astype(jnp.float32) * jnp.sum(w2f, axis=1)

    # Pad C_aux (output sublane dim) to a sublane multiple so stores are
    # unmasked; padded rows are zero and sliced off afterwards.
    sub = 8 if itemsize == 4 else 16
    C_aux_p = ((C_aux + sub - 1) // sub) * sub
    if C_aux_p != C_aux:
        w_eff = jnp.pad(w_eff, ((0, C_aux_p - C_aux), (0, 0)))
        b_eff = jnp.pad(b_eff, (0, C_aux_p - C_aux))
    w_eff = w_eff.astype(x.dtype)         # stream in x's dtype (bf16 for prod)
    b_eff = b_eff.reshape(C_aux_p, 1)     # stays f32; added to f32 accumulator

    # --- x layout: merging (C_in, H) -> K is a free reshape (adjacent axes) ---
    x3 = x.reshape(B, K, W)               # no transpose, no HBM copy

    tk, tw = _pick_tiles(B, K, W, itemsize)
    grid = (B, W // tw, K // tk)

    # Scoped-VMEM budget: double-buffered x / weight / output tiles + f32
    # accumulator; capped at 48 MiB to stay under v7x's 64 MiB physical VMEM.
    tile_bytes = (2 * tk * tw * itemsize
                  + 2 * C_aux_p * tk * itemsize
                  + 2 * C_aux_p * tw * itemsize
                  + C_aux_p * tw * 4
                  + 2 * C_aux_p * 4)
    vmem_limit = int(min(48 << 20, max(32 << 20, 2 * tile_bytes)))

    out_p = pl.pallas_call(
        _fused_kernel,
        out_shape=jax.ShapeDtypeStruct((B, C_aux_p, W), x.dtype),
        grid_spec=pltpu.PrefetchScalarGridSpec(
            num_scalar_prefetch=0,
            grid=grid,
            in_specs=[
                # Fused weight: tiled along K only; block index independent of
                # (b, w) so it is re-used across those steps.
                pl.BlockSpec((C_aux_p, tk), lambda b, w, k: (0, k)),
                # Bias: constant block -> VMEM-resident across the whole grid.
                pl.BlockSpec((C_aux_p, 1), lambda b, w, k: (0, 0)),
                # Streamed activations: one (tk, tw) tile per step, read once.
                pl.BlockSpec((pl.Squeezed(), tk, tw), lambda b, w, k: (b, k, w)),
            ],
            # Output block is constant across the K (reduction) axis -> stays
            # resident and is written once per (b, w) tile at the last K step.
            out_specs=pl.BlockSpec((pl.Squeezed(), C_aux_p, tw),
                                   lambda b, w, k: (b, 0, w)),
            scratch_shapes=[pltpu.VMEM((C_aux_p, tw), jnp.float32)],
        ),
        compiler_params=pltpu.CompilerParams(
            dimension_semantics=("parallel", "parallel", "arbitrary"),
            vmem_limit_bytes=vmem_limit),
        cost_estimate=pl.CostEstimate(
            flops=2 * B * C_aux_p * K * W,
            transcendentals=0,
            bytes_accessed=(x3.size * itemsize
                            + B * (W // tw) * w_eff.size * itemsize
                            + B * C_aux_p * W * itemsize)),
        # TODO(synk): if xprof shows exposed DMA on the x stream at the chosen
        # tile, add pipeline_mode=pl.Buffered(3) to the x BlockSpec.
    )(w_eff, b_eff, x3)

    return out_p[:, :C_aux, :] if C_aux_p != C_aux else out_p


def ref_forward(x, w1, b1, w2, b2):
    # Pure-JAX reference mirroring the PyTorch module (unfused).
    y1 = jnp.einsum("oi,bihw->bohw", w1, x) + b1[None, :, None, None]
    y2 = jnp.einsum("ch,bchw->bcw", w2, y1) + b2[None, :, None]
    return y2


if __name__ == "__main__":
    B, C_in, C_aux, crop_size, W = 2, 4, 8, 16, 16
    H = crop_size

    key = jax.random.PRNGKey(0)
    kx, k1, k2, k3, k4 = jax.random.split(key, 5)

    x = jax.random.normal(kx, (B, C_in, H, W), dtype=jnp.float32)

    # Parameters in squeezed PyTorch layouts:
    #   conv1.weight (C_aux, C_in, 1, 1) -> (C_aux, C_in); conv1.bias -> (C_aux,)
    #   conv2.weight (C_aux, 1, crop, 1) -> (C_aux, crop); conv2.bias -> (C_aux,)
    w1 = jax.random.normal(k1, (C_aux, C_in), dtype=jnp.float32) * 0.1
    b1 = jax.random.normal(k2, (C_aux,), dtype=jnp.float32) * 0.1
    w2 = jax.random.normal(k3, (C_aux, H), dtype=jnp.float32) * 0.1
    b2 = jax.random.normal(k4, (C_aux,), dtype=jnp.float32) * 0.1

    out = jax.block_until_ready(aux_block(x, w1, b1, w2, b2))

    expected = ref_forward(x, w1, b1, w2, b2)
    assert out.shape == (B, C_aux, W), out.shape
    assert jnp.allclose(out, expected, atol=1e-5, rtol=1e-5), (
        float(jnp.max(jnp.abs(out - expected))))

    print("KERNEL_OK")
</pallas_src>

<mosaic_0001>
module attributes {stable_mosaic.version = 11 : i64} {
  func.func @_fused_kernel(%arg0: i32, %arg1: i32, %arg2: i32, %arg3: memref<8x64xf32, #tpu.memory_space<vmem>>, %arg4: memref<8x1xf32, #tpu.memory_space<vmem>>, %arg5: memref<1x64x16xf32, #tpu.memory_space<vmem>>, %arg6: memref<1x8x16xf32, #tpu.memory_space<vmem>>, %arg7: memref<8x16xf32, #tpu.memory_space<vmem>>) attributes {dimension_semantics = [#tpu.dimension_semantics<parallel>, #tpu.dimension_semantics<parallel>, #tpu.dimension_semantics<arbitrary>], iteration_bounds = array<i64: 2, 1, 1>, scalar_prefetch = 0 : i64, scratch_operands = 1 : i64, tpu.core_type = #tpu.core_type<tc>, window_params = [{transform_indices = @transform_0, window_bounds = array<i64: 8, 64>}, {pipeline_mode = #tpu.pipeline_mode<synchronous>, transform_indices = @transform_1, window_bounds = array<i64: 8, 1>}, {transform_indices = @transform_2, window_bounds = array<i64: 1, 64, 16>}, {transform_indices = @transform_3, window_bounds = array<i64: 1, 8, 16>}]} {
    %c0_i32 = arith.constant 0 : i32
    %0 = arith.cmpi eq, %arg2, %c0_i32 : i32
    %1 = arith.extui %0 : i1 to i32
    %c0_i32_0 = arith.constant 0 : i32
    %2 = arith.cmpi ne, %1, %c0_i32_0 : i32
    scf.if %2 {
      %cst_11 = arith.constant 0.000000e+00 : f32
      %13 = vector.broadcast %cst_11 : f32 to vector<8x16xf32>
      %c0_12 = arith.constant 0 : index
      %c0_13 = arith.constant 0 : index
      %14 = vector.load %arg7[%c0_12, %c0_13] : memref<8x16xf32, #tpu.memory_space<vmem>>, vector<8x16xf32>
      tpu.vector_store %arg7[%c0_12, %c0_13], %13 {strides = array<i32>} : memref<8x16xf32, #tpu.memory_space<vmem>>, vector<8x16xf32>,
    } else {
    }
    %c0 = arith.constant 0 : index
    %c0_1 = arith.constant 0 : index
    %3 = vector.load %arg7[%c0, %c0_1] : memref<8x16xf32, #tpu.memory_space<vmem>>, vector<8x16xf32>
    %c0_2 = arith.constant 0 : index
    %c0_3 = arith.constant 0 : index
    %4 = vector.load %arg3[%c0_2, %c0_3] : memref<8x64xf32, #tpu.memory_space<vmem>>, vector<8x64xf32>
    %c0_4 = arith.constant 0 : index
    %c0_5 = arith.constant 0 : index
    %c0_6 = arith.constant 0 : index
    %5 = vector.load %arg5[%c0_4, %c0_5, %c0_6] : memref<1x64x16xf32, #tpu.memory_space<vmem>>, vector<1x64x16xf32>
    %6 = vector.shape_cast %5 : vector<1x64x16xf32> to vector<64x16xf32>
    %cst = arith.constant dense<0.000000e+00> : vector<8x16xf32>
    %7 = tpu.matmul %4, %6, %cst {dimension_numbers = #tpu.dot_dimension_numbers<[1], [0], [0], [1], [0, 0, 1, 1], [], []>} : vector<8x64xf32>, vector<64x16xf32>, vector<8x16xf32> -> vector<8x16xf32>
    %8 = arith.addf %3, %7 : vector<8x16xf32>
    %c0_7 = arith.constant 0 : index
    %c0_8 = arith.constant 0 : index
    %9 = vector.load %arg7[%c0_7, %c0_8] : memref<8x16xf32, #tpu.memory_space<vmem>>, vector<8x16xf32>
    tpu.vector_store %arg7[%c0_7, %c0_8], %8 {strides = array<i32>} : memref<8x16xf32, #tpu.memory_space<vmem>>, vector<8x16xf32>,
    %c0_i32_9 = arith.constant 0 : i32
    %10 = arith.cmpi eq, %arg2, %c0_i32_9 : i32
    %11 = arith.extui %10 : i1 to i32
    %c0_i32_10 = arith.constant 0 : i32
    %12 = arith.cmpi ne, %11, %c0_i32_10 : i32
    scf.if %12 {
      %c0_11 = arith.constant 0 : index
      %c0_12 = arith.constant 0 : index
      %13 = vector.load %arg7[%c0_11, %c0_12] : memref<8x16xf32, #tpu.memory_space<vmem>>, vector<8x16xf32>
      %c0_13 = arith.constant 0 : index
      %c0_14 = arith.constant 0 : index
      %14 = vector.load %arg4[%c0_13, %c0_14] : memref<8x1xf32, #tpu.memory_space<vmem>>, vector<8x1xf32>
      %15 = vector.broadcast %14 : vector<8x1xf32> to vector<8x16xf32>
      %16 = arith.addf %13, %15 : vector<8x16xf32>
      %c0_15 = arith.constant 0 : index
      %c0_16 = arith.constant 0 : index
      %c0_17 = arith.constant 0 : index
      %17 = vector.load %arg6[%c0_15, %c0_16, %c0_17] : memref<1x8x16xf32, #tpu.memory_space<vmem>>, vector<1x8x16xf32>
      %18 = vector.shape_cast %17 : vector<1x8x16xf32> to vector<8x16xf32>
      %19 = vector.shape_cast %16 : vector<8x16xf32> to vector<1x8x16xf32>
      tpu.vector_store %arg6[%c0_15, %c0_16, %c0_17], %19 {strides = array<i32>} : memref<1x8x16xf32, #tpu.memory_space<vmem>>, vector<1x8x16xf32>,
    } else {
    }
    return
  }
  func.func @transform_0(%arg0: i32, %arg1: i32, %arg2: i32) -> (i32, i32) {
    %c0_i32 = arith.constant 0 : i32
    %c0_i32_0 = arith.constant 0 : i32
    return %c0_i32, %arg2 : i32, i32
  }
  func.func @transform_1(%arg0: i32, %arg1: i32, %arg2: i32) -> (i32, i32) {
    %c0_i32 = arith.constant 0 : i32
    %c0_i32_0 = arith.constant 0 : i32
    %c0_i32_1 = arith.constant 0 : i32
    return %c0_i32, %c0_i32_0 : i32, i32
  }
  func.func @transform_2(%arg0: i32, %arg1: i32, %arg2: i32) -> (i32, i32, i32) {
    %c0_i32 = arith.constant 0 : i32
    return %arg0, %arg2, %arg1 : i32, i32, i32
  }
  func.func @transform_3(%arg0: i32, %arg1: i32, %arg2: i32) -> (i32, i32, i32) {
    %c0_i32 = arith.constant 0 : i32
    %c0_i32_0 = arith.constant 0 : i32
    return %arg0, %c0_i32, %arg1 : i32, i32, i32
  }
}

</mosaic_0001>

<llo_original>
// kernel: tpu_custom_call.1
$region0: #{tpu_custom_call.1}
  #allocation0 [shape = 'u32[]', space=smem, size = 0x4, offset = 0x4, fixed_abs, tag = 'smem constant byte address 0x4 - core index']
  #allocation1 [shape = 'u32[144,128]{1,0:T(1,128)}', space=vmem, size = 0x12000, scoped, tag = 'internal scratch']
  #allocation2 [shape = 'f32[8,16]{1,0:T(8,128)}', space=vmem, size = 0x1000, scoped, tag = 'scratch operand']
  %s0 = inlined_call_operand.vmem [shape: f32[8,64], index: 0, kind: input, shape index: {}]
  %s1 = inlined_call_operand.vmem [shape: f32[8,1], index: 1, kind: input, shape index: {}]
  %s2 = inlined_call_operand.vmem [shape: f32[2,64,16], index: 2, kind: input, shape index: {}]
  %s3 = inlined_call_operand.hbm [shape: f32[2,8,16], index: 3, kind: output, shape index: {}]
  %s4 = sld [smem:[#allocation0]]
  $region53: #{tpu_custom_call.1} parent=0
    _
  %s6 = ssub.s32 1, %s4
  %s7 = scalar_select 0, %s6, %s4
  $region1: #{tpu_custom_call.1} parent=0
    #allocation3 [shape = 'u8[8192]{0}', space=vmem, size = 0x2000, scoped, tag = 'output window, operand 0']
    #allocation4 [shape = 's32[2]{0}', space=sflag, size = 0x8, scoped, tag = 'scoped memory for tpu_custom_call.1']
    %8 = vsyncpa [#allocation4], 0
    %s9 = scalar_lea.sflag [#allocation4], 1
    %10 = vsyncpa %s9, 0
    loop: start=0, step=1, limit=4
    $region2: #{tpu_custom_call.1} parent=1 // loop_pre_header
      _
    $region3: #{tpu_custom_call.1} parent=1 // loop_header
      %s12 = sphi 0, %s16
      %p13 = scmp.ge.s32.totalorder %s12, 4
      %s19 = sphi 0, %s38
      %s20 = sphi 0, %s34
      %s21 = sphi 0, %s30
      %s22 = sphi 0, %s19
      %s23 = sphi 0, %s20
      %s24 = sphi 0, %s21
      %s25 = sphi 0, %s22
      %s26 = sphi 0, %s23
      %s27 = sphi 0, %s24
      %s41 = sphi 0, %s43
      %s44 = sphi 0, %s41
      %s45 = sphi 0, %s44
      %s61 = sphi 0, %s45
      %s65 = sphi 0, %s65
      %s67 = sphi 0, %s65
      %s68 = sphi 0, %s67
      %s82 = sphi 0, %s68
      %s92 = sphi 0, %s94
      %s95 = sphi 0, %s92
      %s96 = sphi 0, %s95
      %s112 = sphi 0, %s96
      %s120 = sphi 0, %s122
      %s123 = sphi 0, %s120
      %s124 = sphi 0, %s123
      %s140 = sphi 0, %s124
    $region4: #{tpu_custom_call.1} parent=1 // loop_header_branch
      %15 = sbr.rel (%p13) target = $region8
    $region5: #{tpu_custom_call.1} parent=1 // loop_body
      %s17 = ssub.s32 %s12, 1
      %s18 = ssub.s32 %s12, 2
      %s28 = sadd.s32 1, %s21
      %p29 = scmp.ge.s32.totalorder %s28, 1
      %s30 = scalar_select %p29, 0, %s28
      %s31 = sadd.s32 1, %s20
      %s32 = scalar_select %p29, %s31, %s20
      %p33 = scmp.ge.s32.totalorder %s32, 1
      %s34 = scalar_select %p33, 0, %s32
      %s35 = sadd.s32 1, %s19
      %s36 = scalar_select %p33, %s35, %s19
      %p37 = scmp.ge.s32.totalorder %s36, 2
      %s38 = scalar_select %p37, 0, %s36
      %s39 = ssub.s32 %s21, %s30
      %p40 = scmp.eq.s32.totalorder %s39, 0
      %s42 = sadd.s32 %s41, 1
      %s43 = scalar_select %p40, %s41, %s42
      %p46 = pneg %p40
      %p47 = scmp.eq.s32.totalorder %s12, 1
      %p48 = por %p46, %p47
      %p49 = scmp.ne.s32.totalorder %s41, %s44
      %p50 = scmp.eq.s32.totalorder %s12, 0
      %p51 = por %p49, %p50
      %p52 = scmp.ne.s32.totalorder %s41, %s44
      %p53 = scmp.eq.s32.totalorder %s17, 1
      %p54 = por %p52, %p53
      %p55 = scmp.ne.s32.totalorder %s44, %s45
      %p56 = scmp.eq.s32.totalorder %s17, 0
      %p57 = por %p55, %p56
      %p58 = scmp.ne.s32.totalorder %s44, %s45
      %p59 = scmp.eq.s32.totalorder %s18, 1
      %p60 = por %p58, %p59
      %p62 = scmp.ne.s32.totalorder %s45, %s61
      %p63 = scmp.eq.s32.totalorder %s18, 0
      %p64 = por %p62, %p63
      %s66 = sadd.s32 %s65, 1
      %p69 = scmp.eq.s32.totalorder %s12, 1
      %p70 = scmp.ne.s32.totalorder %s65, %s67
      %p71 = scmp.eq.s32.totalorder %s12, 0
      %p72 = por %p70, %p71
      %p73 = scmp.ne.s32.totalorder %s65, %s67
      %p74 = scmp.eq.s32.totalorder %s17, 1
      %p75 = por %p73, %p74
      %p76 = scmp.ne.s32.totalorder %s67, %s68
      %p77 = scmp.eq.s32.totalorder %s17, 0
      %p78 = por %p76, %p77
      %p79 = scmp.ne.s32.totalorder %s67, %s68
      %p80 = scmp.eq.s32.totalorder %s18, 1
      %p81 = por %p79, %p80
      %p83 = scmp.ne.s32.totalorder %s68, %s82
      %p84 = scmp.eq.s32.totalorder %s18, 0
      %p85 = por %p83, %p84
      %s86 = ssub.s32 %s19, %s38
      %s87 = ssub.s32 %s21, %s30
      %s88 = sor.u32 %s86, %s87
      %s89 = ssub.s32 %s20, %s34
      %s90 = sor.u32 %s88, %s89
      %p91 = scmp.eq.s32.totalorder %s90, 0
      %s93 = sadd.s32 %s92, 1
      %s94 = scalar_select %p91, %s92, %s93
      %p97 = pneg %p91
      %p98 = scmp.eq.s32.totalorder %s12, 1
      %p99 = por %p97, %p98
      %p100 = scmp.ne.s32.totalorder %s92, %s95
      %p101 = scmp.eq.s32.totalorder %s12, 0
      %p102 = por %p100, %p101
      %p103 = scmp.ne.s32.totalorder %s92, %s95
      %p104 = scmp.eq.s32.totalorder %s17, 1
      %p105 = por %p103, %p104
      %p106 = scmp.ne.s32.totalorder %s95, %s96
      %p107 = scmp.eq.s32.totalorder %s17, 0
      %p108 = por %p106, %p107
      %p109 = scmp.ne.s32.totalorder %s95, %s96
      %p110 = scmp.eq.s32.totalorder %s18, 1
      %p111 = por %p109, %p110
      %p113 = scmp.ne.s32.totalorder %s96, %s112
      %p114 = scmp.eq.s32.totalorder %s18, 0
      %p115 = por %p113, %p114
      %s116 = ssub.s32 %s19, %s38
      %s117 = ssub.s32 %s20, %s34
      %s118 = sor.u32 %s116, %s117
      %p119 = scmp.eq.s32.totalorder %s118, 0
      %s121 = sadd.s32 %s120, 1
      %s122 = scalar_select %p119, %s120, %s121
      %p125 = pneg %p119
      %p126 = scmp.eq.s32.totalorder %s12, 1
      %p127 = por %p125, %p126
      %p128 = scmp.ne.s32.totalorder %s120, %s123
      %p129 = scmp.eq.s32.totalorder %s12, 0
      %p130 = por %p128, %p129
      %p131 = scmp.ne.s32.totalorder %s120, %s123
      %p132 = scmp.eq.s32.totalorder %s17, 1
      %p133 = por %p131, %p132
      %p134 = scmp.ne.s32.totalorder %s123, %s124
      %p135 = scmp.eq.s32.totalorder %s17, 0
      %p136 = por %p134, %p135
      %p137 = scmp.ne.s32.totalorder %s123, %s124
      %p138 = scmp.eq.s32.totalorder %s18, 1
      %p139 = por %p137, %p138
      %p141 = scmp.ne.s32.totalorder %s124, %s140
      %p142 = scmp.eq.s32.totalorder %s18, 0
      %p143 = por %p141, %p142
      %p144 = scmp.le.s32.totalorder 1, %s12
      %p145 = scmp.lt.s32.totalorder %s12, 3
      %p146 = pnand %p144, %p145
      %p147 = pneg %p146
      // Predicated region
      $region9: #{tpu_custom_call.1} parent=5 // pred_check
        _
      $region10: #{tpu_custom_call.1} parent=5 // pred_check_branch
        %149 = sbr.rel (%p146) target = $region12
      $region11: #{tpu_custom_call.1} parent=5 // pred_region
        %s150 = ssub.s32 %s12, 1
        // Predicated region
        $region13: #{tpu_custom_call.1} parent=11 // pred_check
          %p151 = pneg %p57
        $region14: #{tpu_custom_call.1} parent=11 // pred_check_branch
          %153 = sbr.rel (%p151) target = $region16
        $region15: #{tpu_custom_call.1} parent=11 // pred_region
          %p154 = scmp.lt.s32.totalorder %s24, 0
          %s155 = scalar_select %p154, %s24, 0
          %s156 = smul.addr %s155, 8
          %s157 = scalar_lea.vmem %s0, %s156
        $region16: #{tpu_custom_call.1} parent=11 // pred_fallthru
          _
        // Predicated region
        $region17: #{tpu_custom_call.1} parent=11 // pred_check
          %p158 = pneg %p78
        $region18: #{tpu_custom_call.1} parent=11 // pred_check_branch
          %160 = sbr.rel (%p158) target = $region20
        $region19: #{tpu_custom_call.1} parent=11 // pred_region
          _
        $region20: #{tpu_custom_call.1} parent=11 // pred_fallthru
          _
      $region12: #{tpu_custom_call.1} parent=5 // pred_fallthru
        _
      %p161 = scmp.lt.s32.totalorder %s12, 2
      // Predicated region
      $region21: #{tpu_custom_call.1} parent=5 // pred_check
        %p162 = pneg %p161
      $region22: #{tpu_custom_call.1} parent=5 // pred_check_branch
        %164 = sbr.rel (%p162) target = $region24
      $region23: #{tpu_custom_call.1} parent=5 // pred_region
        // Predicated region
        $region25: #{tpu_custom_call.1} parent=23 // pred_check
          %p165 = pneg %p102
        $region26: #{tpu_custom_call.1} parent=23 // pred_check_branch
          %167 = sbr.rel (%p165) target = $region28
        $region27: #{tpu_custom_call.1} parent=23 // pred_region
          %s168 = smul.u32 8, %s21
          %p169 = scmp.lt.s32.totalorder %s19, 1
          %s170 = scalar_select %p169, %s19, 1
          %p171 = scmp.lt.s32.totalorder %s168, 7
          %s172 = scalar_select %p171, %s168, 7
          %p173 = scmp.lt.s32.totalorder %s20, 0
          %s174 = scalar_select %p173, %s20, 0
          %s175 = sadd.s32 %s174, %s172
          %s176 = smul.addr %s170, 8
          %s177 = sadd.s32 %s175, %s176
          %s178 = smul.addr %s177, 8
          %s179 = scalar_lea.vmem %s2, %s178
          %s180 = smul.u32 8, %s21
        $region28: #{tpu_custom_call.1} parent=23 // pred_fallthru
          _
      $region24: #{tpu_custom_call.1} parent=5 // pred_fallthru
        _
      %p181 = scmp.le.s32.totalorder 1, %s12
      %p182 = scmp.lt.s32.totalorder %s12, 3
      %p183 = pnand %p181, %p182
      %p184 = pneg %p183
      // Predicated region
      $region29: #{tpu_custom_call.1} parent=5 // pred_check
        _
      $region30: #{tpu_custom_call.1} parent=5 // pred_check_branch
        %186 = sbr.rel (%p183) target = $region32
      $region31: #{tpu_custom_call.1} parent=5 // pred_region
        %s187 = ssub.s32 %s12, 1
        %p188 = scmp.lt.s32.totalorder %s24, 0
        %s189 = scalar_select %p188, %s24, 0
        %s190 = smul.addr %s189, 8
        %s191 = scalar_lea.vmem %s0, %s190
        %p192 = pneg %p57
        %p193 = pneg %p54
        %p194 = pneg %p78
        %p195 = pneg %p75
        %s196 = smul.u32 8, %s24
        %p197 = scmp.lt.s32.totalorder %s22, 1
        %s198 = scalar_select %p197, %s22, 1
        %p199 = scmp.lt.s32.totalorder %s196, 7
        %s200 = scalar_select %p199, %s196, 7
        %p201 = scmp.lt.s32.totalorder %s23, 0
        %s202 = scalar_select %p201, %s23, 0
        %s203 = sadd.s32 %s202, %s200
        %s204 = smul.addr %s198, 8
        %s205 = sadd.s32 %s203, %s204
        %s206 = smul.addr %s205, 8
        %s207 = scalar_lea.vmem %s2, %s206
        %p208 = pneg %p108
        %p209 = pneg %p105
        %p210 = pneg %p136
        %p211 = pneg %p133
        %s212 = sand.u32 %s123, 1
        %s213 = scalar_lea.sflag [#allocation4], %s212
        %s214 = sand.u32 %s123, 1
        %s215 = smul.addr %s214, 8
        %s216 = scalar_lea.vmem [#allocation3], %s215
        %p217 = scmp.lt.s32.totalorder %s24, 0
        %s218 = scalar_select %p217, %s24, 0
        %s219 = smul.addr %s218, 8
        %s220 = scalar_lea.vmem %s0, %s219
        %s221 = smul.u32 8, %s24
        %p222 = scmp.lt.s32.totalorder %s22, 1
        %s223 = scalar_select %p222, %s22, 1
        %p224 = scmp.lt.s32.totalorder %s221, 7
        %s225 = scalar_select %p224, %s221, 7
        %p226 = scmp.lt.s32.totalorder %s23, 0
        %s227 = scalar_select %p226, %s23, 0
        %s228 = sadd.s32 %s227, %s225
        %s229 = smul.addr %s223, 8
        %s230 = sadd.s32 %s228, %s229
        %s231 = smul.addr %s230, 8
        %s232 = scalar_lea.vmem %s2, %s231
        %s233 = smul.u32 8, %s24
        %p234 = scmp.eq.s32.totalorder %s24, 0
        // Predicated region
        $region33: #{tpu_custom_call.1} parent=31 // pred_check
          %p235 = pneg %p234
        $region34: #{tpu_custom_call.1} parent=31 // pred_check_branch
          %237 = sbr.rel (%p235) target = $region36
        $region35: #{tpu_custom_call.1} parent=31 // pred_region
          %vm238 = vcmask 130048
          %239 = vst.msk [vmem:[#allocation2] sm:$0xff] %vm238, 0.0
        $region36: #{tpu_custom_call.1} parent=31 // pred_fallthru
          _
        %v240 = vld [vmem:[#allocation2] sm:$0xff]
        %v241 = vld [vmem:[%s220] sm:$0xff]
        %v242 = vld [vmem:[%s232] sm:$0xff]
        %v243 = vld [vmem:[%s232 + $0x8] sm:$0xff]
        %v244 = vld [vmem:[%s232 + $0x10] sm:$0xff]
        %v245 = vld [vmem:[%s232 + $0x18] sm:$0xff]
        %v246 = vld [vmem:[%s232 + $0x20] sm:$0xff]
        %v247 = vld [vmem:[%s232 + $0x28] sm:$0xff]
        %v248 = vld [vmem:[%s232 + $0x30] sm:$0xff]
        %v249 = vld [vmem:[%s232 + $0x38] sm:$0xff]
        %vm250 = vcmask 523264
        %v252 = vsel %vm250, %v241, 0
        %254 = vmatprep.subr.mxu0 0.0
        %255 = vmatpush1.msra.mxu0 0.0
        %256 = vmatprep.subr.mxu0 0.0
        %257 = vmatpush1.msra.mxu0 0.0
        %258 = vmatprep.subr.mxu0 0.0
        %259 = vmatpush1.msra.mxu0 0.0
        %260 = vmatprep.subr.mxu0 0.0
        %261 = vmatpush1.msra.mxu0 0.0
        %262 = vmatprep.subr.mxu0 0.0
        %263 = vmatpush1.msra.mxu0 0.0
        %264 = vmatprep.subr.mxu0 0.0
        %265 = vmatpush1.msra.mxu0 0.0
        %266 = vmatprep.subr.mxu0 0.0
        %267 = vmatpush1.msra.mxu0 0.0
        %268 = vmatprep.subr.mxu0 0.0
        %269 = vmatpush1.msra.mxu0 0.0
        %270 = vmatprep.subr.mxu0 0.0
        %271 = vmatpush1.msra.mxu0 %v249
        %272 = vmatprep.subr.mxu0 0.0
        %273 = vmatpush1.msra.mxu0 %v248
        %274 = vmatprep.subr.mxu0 0.0
        %275 = vmatpush1.msra.mxu0 %v247
        %276 = vmatprep.subr.mxu0 0.0
        %277 = vmatpush1.msra.mxu0 %v246
        %278 = vmatprep.subr.mxu0 0.0
        %279 = vmatpush1.msra.mxu0 %v245
        %280 = vmatprep.subr.mxu0 0.0
        %281 = vmatpush1.msra.mxu0 %v244
        %282 = vmatprep.subr.mxu0 0.0
        %283 = vmatpush1.msra.mxu0 %v243
        %284 = vmatprep.subr.mxu0 0.0
        %285 = vmatpush1.msra.mxu0 %v242
        %286 = vmatprep.subr.mxu0 0.0
        %287 = vmatpush2.msra.mxu0 0.0
        %288 = vmatprep.subr.mxu0 0.0
        %289 = vmatpush2.msra.mxu0 0.0
        %290 = vmatprep.subr.mxu0 0.0
        %291 = vmatpush2.msra.mxu0 0.0
        %292 = vmatprep.subr.mxu0 0.0
        %293 = vmatpush2.msra.mxu0 0.0
        %294 = vmatprep.subr.mxu0 0.0
        %295 = vmatpush2.msra.mxu0 0.0
        %296 = vmatprep.subr.mxu0 0.0
        %297 = vmatpush2.msra.mxu0 0.0
        %298 = vmatprep.subr.mxu0 0.0
        %299 = vmatpush2.msra.mxu0 0.0
        %300 = vmatprep.subr.mxu0 0.0
        %301 = vmatpush2.msra.mxu0 0.0
        %302 = vmatprep.subr.mxu0 0.0
        %303 = vmatpush2.msra.mxu0 0.0
        %304 = vmatprep.subr.mxu0 0.0
        %305 = vmatpush2.msra.mxu0 0.0
        %306 = vmatprep.subr.mxu0 0.0
        %307 = vmatpush2.msra.mxu0 0.0
        %308 = vmatprep.subr.mxu0 0.0
        %309 = vmatpush2.msra.mxu0 0.0
        %310 = vmatprep.subr.mxu0 0.0
        %311 = vmatpush2.msra.mxu0 0.0
        %312 = vmatprep.subr.mxu0 0.0
        %313 = vmatpush2.msra.mxu0 0.0
        %314 = vmatprep.subr.mxu0 0.0
        %315 = vmatpush2.msra.mxu0 0.0
        %316 = vmatprep.subr.mxu0 0.0
        %317 = vmatpush2.msra.mxu0 0.0
        %318 = vmatprep.mubr.f32.mxu0 0.0
        %319 = vmatmul.mubr.f32.gmra.mxu0 %v252
        %v320 = vpop.f32.mrf.mxu0
        %v321 = vadd.f32 0.0, %v320
        %v322 = vpop.f32.mrf.mxu0
        %323 = vdwg.mxu0
        %v324 = vadd.f32 %v240, %v321
        %vm325 = vcmask 130048
        %326 = vst.msk [vmem:[#allocation2] sm:$0xff] %vm325, %v324
        // Predicated region
        $region37: #{tpu_custom_call.1} parent=31 // pred_check
          %p327 = pneg %p234
        $region38: #{tpu_custom_call.1} parent=31 // pred_check_branch
          %329 = sbr.rel (%p327) target = $region40
        $region39: #{tpu_custom_call.1} parent=31 // pred_region
          %v330 = vld [vmem:[#allocation2] sm:$0xff]
          %v331 = vld [vmem:[%s1] sm:$0xff]
          %333 = vset.pattern.permute.xlu0 0
          %334 = vperm.xlu0 %333, %v331
          %v335 = vpop.permute.xlu0 %334
          %v337 = vadd.f32 %v330, %v335
          %338 = vst.msk [vmem:[%s216] sm:$0xff] %vm325, %v337
        $region40: #{tpu_custom_call.1} parent=31 // pred_fallthru
          _
        %s339 = sand.u32 %s123, 1
        %s340 = scalar_lea.sflag [#allocation4], %s339
        %s341 = sand.u32 %s123, 1
        %s342 = smul.addr %s341, 8
        %s343 = scalar_lea.vmem [#allocation3], %s342
        // Predicated region
        $region41: #{tpu_custom_call.1} parent=31 // pred_check
          %p344 = pneg %p133
        $region42: #{tpu_custom_call.1} parent=31 // pred_check_branch
          %346 = sbr.rel (%p344) target = $region44
        $region43: #{tpu_custom_call.1} parent=31 // pred_region
          %s348 = ssub.s32 128, 128
          %349 = vsyncadd %s340, %s348
          %s350 = sadd.s32 %s23, %s22
          %s351 = smul.addr %s350, 128
          %s352 = scalar_lea.hbm %s3, %s351
          %s354 = sshll.u32 %s343, 4
          %s355 = int_to_ptr.vmem [resolvable:$true] %s354
          %357 = dma.vmem_to_hbm [thread:$0]  %s355, 128, %s352, %s340
        $region44: #{tpu_custom_call.1} parent=31 // pred_fallthru
          _
      $region32: #{tpu_custom_call.1} parent=5 // pred_fallthru
        _
      %p358 = scmp.le.s32.totalorder 2, %s12
      // Predicated region
      $region45: #{tpu_custom_call.1} parent=5 // pred_check
        %p359 = pneg %p358
      $region46: #{tpu_custom_call.1} parent=5 // pred_check_branch
        %361 = sbr.rel (%p359) target = $region48
      $region47: #{tpu_custom_call.1} parent=5 // pred_region
        %s362 = ssub.s32 %s12, 2
        // Predicated region
        $region49: #{tpu_custom_call.1} parent=47 // pred_check
          %p363 = pneg %p139
        $region50: #{tpu_custom_call.1} parent=47 // pred_check_branch
          %365 = sbr.rel (%p363) target = $region52
        $region51: #{tpu_custom_call.1} parent=47 // pred_region
          %s366 = sand.u32 %s124, 1
          %s367 = scalar_lea.sflag [#allocation4], %s366
          %s368 = sand.u32 %s124, 1
          %s369 = smul.addr %s368, 8
          %s370 = scalar_lea.vmem [#allocation3], %s369
          %371 = dma.done %s367, 128
        $region52: #{tpu_custom_call.1} parent=47 // pred_fallthru
          _
      $region48: #{tpu_custom_call.1} parent=5 // pred_fallthru
        _
    $region6: #{tpu_custom_call.1} parent=1 // loop_footer
      %s16 = sadd.s32 1, %s12
    $region7: #{tpu_custom_call.1} parent=1 // loop_footer_branch
      %11 = sbr.rel target = $region3
    $region8: #{tpu_custom_call.1} parent=1 // loop_exit
      _
    %372 = vsyncpa [#allocation4], 1
    %s373 = scalar_lea.sflag [#allocation4], 1
    %374 = vsyncpa %s373, 1

</llo_original>
